<compile_context>
chip_gen: v7x
topology: tpu7x:2x2x1
jax: 0.10.0
libtpu: 0.0.40
codegen_flags: <defaults>
</compile_context>

<pallas_src>
import jax
import jax.numpy as jnp
from jax.experimental import pallas as pl
from jax.experimental.pallas import tpu as pltpu


def _round_up(x, m):
    return ((x + m - 1) // m) * m


def _default_m_tile():
    # 256-row M tiles match v6e/v7x's 2x256 MXU; 128 rows already saturate v5e's
    # 4x128x128 MXU.  Fall back to 128 if the device kind can't be queried.
    try:
        kind = jax.devices()[0].device_kind.lower()
        if "v6" in kind or "v7" in kind:
            return 256
    except Exception:
        pass
    return 128


def _patch_embed_kernel(p_ref, w_ref, pe_ref, o_ref, acc_ref):
    # p_ref  : (tm, tk)  bf16  patch rows, current K-slab
    # w_ref  : (tk, Hp)  bf16  projection weight, current K-slab
    # pe_ref : (tm, Hp)  f32   position embeddings with bias folded in
    # o_ref  : (tm, Hp)        output tile (written on the last K step)
    # acc_ref: (tm, Hp)  f32   accumulator scratch, resident across K steps
    k = pl.program_id(1)

    @pl.when(k == 0)
    def _init():
        acc_ref[...] = jnp.zeros_like(acc_ref)

    acc_ref[...] += jnp.dot(p_ref[...], w_ref[...],
                            preferred_element_type=jnp.float32)

    @pl.when(k == pl.num_programs(1) - 1)
    def _finalize():
        o_ref[...] = (acc_ref[...] + pe_ref[...]).astype(o_ref.dtype)


def patch_embedding_forward(x, weight, bias, pos_emb, patch_size, *,
                            m_tile=None, k_tile=512):
    """x: (B, C, D, H, W).  weight: (hidden, C, pD, pH, pW) (Conv3d weight).
    bias: (hidden,).  pos_emb: (1, n_patches, hidden).
    Returns (B, n_patches, hidden) — identical to the PyTorch module's forward
    with pos_embed='conv', pos_embedding_type=True, dropout_rate=0.0."""
    B, C, D, H, W = x.shape
    pD, pH, pW = patch_size
    gD, gH, gW = D // pD, H // pH, W // pW
    n_patches = gD * gH * gW
    hidden = weight.shape[0]
    patch_dim = C * pD * pH * pW

    # ---- glue: patch extraction (matches Conv3d stride=kernel=patch followed by
    # flatten(2).transpose(-1,-2); patch order (gd, gh, gw), feature order (C, pd, ph, pw))
    # TODO(synk): fuse this transpose into the kernel via per-patch BlockSpec DMAs to
    # avoid the extra HBM round-trip of the activation at large ViT-3D sizes.
    xp = x.reshape(B, C, gD, pD, gH, pH, gW, pW)
    xp = xp.transpose(0, 2, 4, 6, 1, 3, 5, 7)
    patches = xp.reshape(B * n_patches, patch_dim)

    # conv weight (hidden, C, pD, pH, pW) -> (patch_dim, hidden)
    w2d = weight.reshape(hidden, patch_dim).T

    # fold the bias into the position-embedding table and tile it over batch
    pe = pos_emb.reshape(n_patches, hidden) + bias[None, :]
    pe = jnp.broadcast_to(pe[None], (B, n_patches, hidden)).reshape(B * n_patches, hidden)

    # ---- tiling / padding ----
    M = B * n_patches
    tm = _default_m_tile() if m_tile is None else m_tile
    tm = min(tm, _round_up(M, 8))                    # don't over-pad tiny M
    tk = min(k_tile, _round_up(patch_dim, 128))
    M_pad = _round_up(M, tm)
    K_pad = _round_up(patch_dim, tk)
    H_pad = _round_up(hidden, 128)                   # lane-dense output stores

    patches_p = jnp.pad(patches.astype(jnp.bfloat16),
                        ((0, M_pad - M), (0, K_pad - patch_dim)))
    w_p = jnp.pad(w2d.astype(jnp.bfloat16),
                  ((0, K_pad - patch_dim), (0, H_pad - hidden)))
    pe_p = jnp.pad(pe.astype(jnp.float32),
                   ((0, M_pad - M), (0, H_pad - hidden)))

    out = pl.pallas_call(
        _patch_embed_kernel,
        out_shape=jax.ShapeDtypeStruct((M_pad, H_pad), x.dtype),
        grid_spec=pltpu.PrefetchScalarGridSpec(
            num_scalar_prefetch=0,
            grid=(M_pad // tm, K_pad // tk),
            in_specs=[
                pl.BlockSpec((tm, tk), lambda m, k: (m, k)),        # patches
                pl.BlockSpec((tk, H_pad), lambda m, k: (k, 0)),     # weight K-slab
                pl.BlockSpec((tm, H_pad), lambda m, k: (m, 0)),     # pos-emb (+bias)
            ],
            out_specs=pl.BlockSpec((tm, H_pad), lambda m, k: (m, 0)),
            scratch_shapes=[pltpu.VMEM((tm, H_pad), jnp.float32)],
        ),
        compiler_params=pltpu.CompilerParams(
            dimension_semantics=("parallel", "arbitrary"),
            vmem_limit_bytes=48 * 1024 * 1024,
        ),
    )(patches_p, w_p, pe_p)

    return out[:M, :hidden].reshape(B, n_patches, hidden)


if __name__ == "__main__":
    # Small config consistent with the module:
    # in_channels=4, img_size=16 (3D -> 16,16,16), patch_size=8, hidden_size=32,
    # num_heads=4, pos_embed="conv", dropout_rate=0.0
    B, C = 2, 4
    img_size = (16, 16, 16)
    patch_size = (8, 8, 8)
    hidden = 32
    gD, gH, gW = (i // p for i, p in zip(img_size, patch_size))
    n_patches = gD * gH * gW
    patch_dim = C * patch_size[0] * patch_size[1] * patch_size[2]

    key = jax.random.PRNGKey(0)
    k_x, k_w, k_b, k_pe = jax.random.split(key, 4)

    x = jax.random.normal(k_x, (B, C) + img_size, dtype=jnp.float32)
    # Deterministic synthetic parameter init (shapes match Conv3d / nn.Parameter).
    weight = jax.random.normal(k_w, (hidden, C) + patch_size, dtype=jnp.float32) * 0.02
    bias = jax.random.normal(k_b, (hidden,), dtype=jnp.float32) * 0.01
    # trunc_normal_(std=0.02, a=-2, b=2) equivalent for position embeddings
    pos_emb = 0.02 * jax.random.truncated_normal(
        k_pe, -2.0, 2.0, (1, n_patches, hidden), dtype=jnp.float32
    )
    # TODO(synk): dropout_rate=0.0 -> dropout is identity; nonzero rates not implemented.

    out = patch_embedding_forward(x, weight, bias, pos_emb, patch_size)
    out = jax.block_until_ready(out)

    # ---- reference checks (plain JAX) ----
    xp = x.reshape(B, C, gD, patch_size[0], gH, patch_size[1], gW, patch_size[2])
    xp = xp.transpose(0, 2, 4, 6, 1, 3, 5, 7).reshape(B, n_patches, patch_dim)
    w2d = weight.reshape(hidden, patch_dim).T

    # f32 reference (loose tolerance: kernel uses bf16 operands with f32 accumulation)
    ref_f32 = xp @ w2d + bias[None, None, :] + pos_emb
    # bf16-operand reference (tighter: isolates accumulation-order differences)
    ref_bf16 = (xp.astype(jnp.bfloat16).astype(jnp.float32)
                @ w2d.astype(jnp.bfloat16).astype(jnp.float32)
                + bias[None, None, :] + pos_emb)

    assert out.shape == (B, n_patches, hidden)
    assert jnp.allclose(out, ref_f32, atol=5e-2, rtol=5e-2)
    assert jnp.allclose(out, ref_bf16, atol=2e-2, rtol=2e-2)

    print("KERNEL_OK")
</pallas_src>

<mosaic_0001>
module attributes {stable_mosaic.version = 11 : i64} {
  func.func @_patch_embed_kernel(%arg0: i32, %arg1: i32, %arg2: memref<16x512xbf16, #tpu.memory_space<vmem>>, %arg3: memref<512x128xbf16, #tpu.memory_space<vmem>>, %arg4: memref<16x128xf32, #tpu.memory_space<vmem>>, %arg5: memref<16x128xf32, #tpu.memory_space<vmem>>, %arg6: memref<16x128xf32, #tpu.memory_space<vmem>>) attributes {dimension_semantics = [#tpu.dimension_semantics<parallel>, #tpu.dimension_semantics<arbitrary>], iteration_bounds = array<i64: 1, 4>, scalar_prefetch = 0 : i64, scratch_operands = 1 : i64, tpu.core_type = #tpu.core_type<tc>, window_params = [{transform_indices = @transform_0, window_bounds = array<i64: 16, 512>}, {transform_indices = @transform_1, window_bounds = array<i64: 512, 128>}, {transform_indices = @transform_2, window_bounds = array<i64: 16, 128>}, {transform_indices = @transform_3, window_bounds = array<i64: 16, 128>}]} {
    %c0_i32 = arith.constant 0 : i32
    %0 = arith.cmpi eq, %arg1, %c0_i32 : i32
    %1 = arith.extui %0 : i1 to i32
    %c0_i32_0 = arith.constant 0 : i32
    %2 = arith.cmpi ne, %1, %c0_i32_0 : i32
    scf.if %2 {
      %cst_9 = arith.constant 0.000000e+00 : f32
      %12 = vector.broadcast %cst_9 : f32 to vector<16x128xf32>
      %c0_10 = arith.constant 0 : index
      %c0_11 = arith.constant 0 : index
      %13 = vector.load %arg6[%c0_10, %c0_11] : memref<16x128xf32, #tpu.memory_space<vmem>>, vector<16x128xf32>
      tpu.vector_store %arg6[%c0_10, %c0_11], %12 {strides = array<i32>} : memref<16x128xf32, #tpu.memory_space<vmem>>, vector<16x128xf32>,
    } else {
    }
    %c0 = arith.constant 0 : index
    %c0_1 = arith.constant 0 : index
    %3 = vector.load %arg6[%c0, %c0_1] : memref<16x128xf32, #tpu.memory_space<vmem>>, vector<16x128xf32>
    %c0_2 = arith.constant 0 : index
    %c0_3 = arith.constant 0 : index
    %4 = vector.load %arg2[%c0_2, %c0_3] : memref<16x512xbf16, #tpu.memory_space<vmem>>, vector<16x512xbf16>
    %c0_4 = arith.constant 0 : index
    %c0_5 = arith.constant 0 : index
    %5 = vector.load %arg3[%c0_4, %c0_5] : memref<512x128xbf16, #tpu.memory_space<vmem>>, vector<512x128xbf16>
    %cst = arith.constant dense<0.000000e+00> : vector<16x128xf32>
    %6 = tpu.matmul %4, %5, %cst {dimension_numbers = #tpu.dot_dimension_numbers<[1], [0], [0], [1], [0, 0, 1, 1], [], []>} : vector<16x512xbf16>, vector<512x128xbf16>, vector<16x128xf32> -> vector<16x128xf32>
    %7 = arith.addf %3, %6 : vector<16x128xf32>
    %c0_6 = arith.constant 0 : index
    %c0_7 = arith.constant 0 : index
    %8 = vector.load %arg6[%c0_6, %c0_7] : memref<16x128xf32, #tpu.memory_space<vmem>>, vector<16x128xf32>
    tpu.vector_store %arg6[%c0_6, %c0_7], %7 {strides = array<i32>} : memref<16x128xf32, #tpu.memory_space<vmem>>, vector<16x128xf32>,
    %c3_i32 = arith.constant 3 : i32
    %9 = arith.cmpi eq, %arg1, %c3_i32 : i32
    %10 = arith.extui %9 : i1 to i32
    %c0_i32_8 = arith.constant 0 : i32
    %11 = arith.cmpi ne, %10, %c0_i32_8 : i32
    scf.if %11 {
      %c0_9 = arith.constant 0 : index
      %c0_10 = arith.constant 0 : index
      %12 = vector.load %arg6[%c0_9, %c0_10] : memref<16x128xf32, #tpu.memory_space<vmem>>, vector<16x128xf32>
      %c0_11 = arith.constant 0 : index
      %c0_12 = arith.constant 0 : index
      %13 = vector.load %arg4[%c0_11, %c0_12] : memref<16x128xf32, #tpu.memory_space<vmem>>, vector<16x128xf32>
      %14 = arith.addf %12, %13 : vector<16x128xf32>
      %c0_13 = arith.constant 0 : index
      %c0_14 = arith.constant 0 : index
      %15 = vector.load %arg5[%c0_13, %c0_14] : memref<16x128xf32, #tpu.memory_space<vmem>>, vector<16x128xf32>
      tpu.vector_store %arg5[%c0_13, %c0_14], %14 {strides = array<i32>} : memref<16x128xf32, #tpu.memory_space<vmem>>, vector<16x128xf32>,
    } else {
    }
    return
  }
  func.func @transform_0(%arg0: i32, %arg1: i32) -> (i32, i32) {
    %c0_i32 = arith.constant 0 : i32
    return %arg0, %arg1 : i32, i32
  }
  func.func @transform_1(%arg0: i32, %arg1: i32) -> (i32, i32) {
    %c0_i32 = arith.constant 0 : i32
    %c0_i32_0 = arith.constant 0 : i32
    return %arg1, %c0_i32 : i32, i32
  }
  func.func @transform_2(%arg0: i32, %arg1: i32) -> (i32, i32) {
    %c0_i32 = arith.constant 0 : i32
    %c0_i32_0 = arith.constant 0 : i32
    return %arg0, %c0_i32 : i32, i32
  }
  func.func @transform_3(%arg0: i32, %arg1: i32) -> (i32, i32) {
    %c0_i32 = arith.constant 0 : i32
    %c0_i32_0 = arith.constant 0 : i32
    return %arg0, %c0_i32 : i32, i32
  }
}

</mosaic_0001>

<llo_original>
// kernel: tpu_custom_call.1
$region0: #{tpu_custom_call.1}
  #allocation0 [shape = 'u32[]', space=smem, size = 0x4, offset = 0x4, fixed_abs, tag = 'smem constant byte address 0x4 - core index']
  #allocation1 [shape = 'u32[144,128]{1,0:T(1,128)}', space=vmem, size = 0x12000, scoped, tag = 'internal scratch']
  #allocation2 [shape = 'f32[16,128]{1,0:T(8,128)}', space=vmem, size = 0x2000, scoped, tag = 'scratch operand']
  %s0 = inlined_call_operand.hbm [shape: bf16[16,2048], index: 0, kind: input, shape index: {}]
  %s1 = inlined_call_operand.hbm [shape: bf16[2048,128], index: 1, kind: input, shape index: {}]
  %s2 = inlined_call_operand.hbm [shape: f32[16,128], index: 2, kind: input, shape index: {}]
  %s3 = inlined_call_operand.hbm [shape: f32[16,128], index: 3, kind: output, shape index: {}]
  %s4 = sld [smem:[#allocation0]]
  $region65: #{tpu_custom_call.1} parent=0
    _
  %s6 = ssub.s32 1, %s4
  %s7 = scalar_select 0, %s6, %s4
  $region1: #{tpu_custom_call.1} parent=0
    #allocation3 [shape = 'u8[32768]{0}', space=vmem, size = 0x8000, scoped, tag = 'input window, operand 0']
    #allocation4 [shape = 's32[2]{0}', space=sflag, size = 0x8, scoped, tag = 'scoped memory for tpu_custom_call.1']
    #allocation5 [shape = 's32[2]{0}', space=sflag, size = 0x8, scoped, tag = 'scoped memory for tpu_custom_call.1']
    #allocation6 [shape = 'u8[262144]{0}', space=vmem, size = 0x40000, scoped, tag = 'input window, operand 1']
    #allocation7 [shape = 's32[2]{0}', space=sflag, size = 0x8, scoped, tag = 'scoped memory for tpu_custom_call.1']
    #allocation8 [shape = 'u8[8192]{0}', space=vmem, size = 0x2000, scoped, tag = 'input window, operand 2, single buffered']
    #allocation9 [shape = 'u8[8192]{0}', space=vmem, size = 0x2000, scoped, tag = 'output window, operand 0, single buffered']
    %8 = vsyncpa [#allocation4], 0
    %s9 = scalar_lea.sflag [#allocation4], 1
    %10 = vsyncpa %s9, 0
    %11 = vsyncpa [#allocation7], 0
    %s12 = scalar_lea.sflag [#allocation7], 1
    %13 = vsyncpa %s12, 0
    %14 = vsyncpa [#allocation5], 0
    loop: start=0, step=1, limit=6
    $region2: #{tpu_custom_call.1} parent=1 // loop_pre_header
      _
    $region3: #{tpu_custom_call.1} parent=1 // loop_header
      %s16 = sphi 0, %s20
      %p17 = scmp.ge.s32.totalorder %s16, 6
      %s23 = sphi 0, %s35
      %s24 = sphi 0, %s31
      %s25 = sphi 0, %s23
      %s26 = sphi 0, %s24
      %s27 = sphi 0, %s25
      %s28 = sphi 0, %s26
      %s40 = sphi 0, %s42
      %s43 = sphi 0, %s40
      %s44 = sphi 0, %s43
      %s60 = sphi 0, %s44
      %s66 = sphi 0, %s68
      %s69 = sphi 0, %s66
      %s70 = sphi 0, %s69
      %s86 = sphi 0, %s70
      %s92 = sphi 0, %s94
      %s95 = sphi 0, %s92
      %s96 = sphi 0, %s95
      %s112 = sphi 0, %s96
      %s118 = sphi 0, %s120
      %s121 = sphi 0, %s118
      %s122 = sphi 0, %s121
      %s138 = sphi 0, %s122
    $region4: #{tpu_custom_call.1} parent=1 // loop_header_branch
      %19 = sbr.rel (%p17) target = $region8
    $region5: #{tpu_custom_call.1} parent=1 // loop_body
      %s21 = ssub.s32 %s16, 1
      %s22 = ssub.s32 %s16, 2
      %s29 = sadd.s32 1, %s24
      %p30 = scmp.ge.s32.totalorder %s29, 4
      %s31 = scalar_select %p30, 0, %s29
      %s32 = sadd.s32 1, %s23
      %s33 = scalar_select %p30, %s32, %s23
      %p34 = scmp.ge.s32.totalorder %s33, 1
      %s35 = scalar_select %p34, 0, %s33
      %s36 = ssub.s32 %s23, %s35
      %s37 = ssub.s32 %s24, %s31
      %s38 = sor.u32 %s36, %s37
      %p39 = scmp.eq.s32.totalorder %s38, 0
      %s41 = sadd.s32 %s40, 1
      %s42 = scalar_select %p39, %s40, %s41
      %p45 = pneg %p39
      %p46 = scmp.eq.s32.totalorder %s16, 3
      %p47 = por %p45, %p46
      %p48 = scmp.ne.s32.totalorder %s40, %s43
      %p49 = scmp.eq.s32.totalorder %s16, 0
      %p50 = por %p48, %p49
      %p51 = scmp.ne.s32.totalorder %s40, %s43
      %p52 = scmp.eq.s32.totalorder %s21, 3
      %p53 = por %p51, %p52
      %p54 = scmp.ne.s32.totalorder %s43, %s44
      %p55 = scmp.eq.s32.totalorder %s21, 0
      %p56 = por %p54, %p55
      %p57 = scmp.ne.s32.totalorder %s43, %s44
      %p58 = scmp.eq.s32.totalorder %s22, 3
      %p59 = por %p57, %p58
      %p61 = scmp.ne.s32.totalorder %s44, %s60
      %p62 = scmp.eq.s32.totalorder %s22, 0
      %p63 = por %p61, %p62
      %s64 = ssub.s32 %s24, %s31
      %p65 = scmp.eq.s32.totalorder %s64, 0
      %s67 = sadd.s32 %s66, 1
      %s68 = scalar_select %p65, %s66, %s67
      %p71 = pneg %p65
      %p72 = scmp.eq.s32.totalorder %s16, 3
      %p73 = por %p71, %p72
      %p74 = scmp.ne.s32.totalorder %s66, %s69
      %p75 = scmp.eq.s32.totalorder %s16, 0
      %p76 = por %p74, %p75
      %p77 = scmp.ne.s32.totalorder %s66, %s69
      %p78 = scmp.eq.s32.totalorder %s21, 3
      %p79 = por %p77, %p78
      %p80 = scmp.ne.s32.totalorder %s69, %s70
      %p81 = scmp.eq.s32.totalorder %s21, 0
      %p82 = por %p80, %p81
      %p83 = scmp.ne.s32.totalorder %s69, %s70
      %p84 = scmp.eq.s32.totalorder %s22, 3
      %p85 = por %p83, %p84
      %p87 = scmp.ne.s32.totalorder %s70, %s86
      %p88 = scmp.eq.s32.totalorder %s22, 0
      %p89 = por %p87, %p88
      %s90 = ssub.s32 %s23, %s35
      %p91 = scmp.eq.s32.totalorder %s90, 0
      %s93 = sadd.s32 %s92, 1
      %s94 = scalar_select %p91, %s92, %s93
      %p97 = pneg %p91
      %p98 = scmp.eq.s32.totalorder %s16, 3
      %p99 = por %p97, %p98
      %p100 = scmp.ne.s32.totalorder %s92, %s95
      %p101 = scmp.eq.s32.totalorder %s16, 0
      %p102 = por %p100, %p101
      %p103 = scmp.ne.s32.totalorder %s92, %s95
      %p104 = scmp.eq.s32.totalorder %s21, 3
      %p105 = por %p103, %p104
      %p106 = scmp.ne.s32.totalorder %s95, %s96
      %p107 = scmp.eq.s32.totalorder %s21, 0
      %p108 = por %p106, %p107
      %p109 = scmp.ne.s32.totalorder %s95, %s96
      %p110 = scmp.eq.s32.totalorder %s22, 3
      %p111 = por %p109, %p110
      %p113 = scmp.ne.s32.totalorder %s96, %s112
      %p114 = scmp.eq.s32.totalorder %s22, 0
      %p115 = por %p113, %p114
      %s116 = ssub.s32 %s23, %s35
      %p117 = scmp.eq.s32.totalorder %s116, 0
      %s119 = sadd.s32 %s118, 1
      %s120 = scalar_select %p117, %s118, %s119
      %p123 = pneg %p117
      %p124 = scmp.eq.s32.totalorder %s16, 3
      %p125 = por %p123, %p124
      %p126 = scmp.ne.s32.totalorder %s118, %s121
      %p127 = scmp.eq.s32.totalorder %s16, 0
      %p128 = por %p126, %p127
      %p129 = scmp.ne.s32.totalorder %s118, %s121
      %p130 = scmp.eq.s32.totalorder %s21, 3
      %p131 = por %p129, %p130
      %p132 = scmp.ne.s32.totalorder %s121, %s122
      %p133 = scmp.eq.s32.totalorder %s21, 0
      %p134 = por %p132, %p133
      %p135 = scmp.ne.s32.totalorder %s121, %s122
      %p136 = scmp.eq.s32.totalorder %s22, 3
      %p137 = por %p135, %p136
      %p139 = scmp.ne.s32.totalorder %s122, %s138
      %p140 = scmp.eq.s32.totalorder %s22, 0
      %p141 = por %p139, %p140
      %p142 = scmp.le.s32.totalorder 1, %s16
      %p143 = scmp.lt.s32.totalorder %s16, 5
      %p144 = pnand %p142, %p143
      %p145 = pneg %p144
      // Predicated region
      $region9: #{tpu_custom_call.1} parent=5 // pred_check
        _
      $region10: #{tpu_custom_call.1} parent=5 // pred_check_branch
        %147 = sbr.rel (%p144) target = $region12
      $region11: #{tpu_custom_call.1} parent=5 // pred_region
        %s148 = ssub.s32 %s16, 1
        // Predicated region
        $region13: #{tpu_custom_call.1} parent=11 // pred_check
          %p149 = pneg %p108
        $region14: #{tpu_custom_call.1} parent=11 // pred_check_branch
          %151 = sbr.rel (%p149) target = $region16
        $region15: #{tpu_custom_call.1} parent=11 // pred_region
          %s152 = smul.u32 2, %s25
          %s154 = ssub.s32 256, 256
          %155 = vsyncadd [#allocation7], %s154
          %s156 = smul.addr %s152, 128
          %s157 = scalar_lea.hbm %s2, %s156
          %s158 = sshll.u32 [#allocation8], 4
          %s159 = int_to_ptr.vmem [resolvable:$true] %s158
          %164 = dma.hbm_to_vmem [thread:$0]  %s157, 256, %s159, [#allocation7], 128, 128, 8
        $region16: #{tpu_custom_call.1} parent=11 // pred_fallthru
          _
      $region12: #{tpu_custom_call.1} parent=5 // pred_fallthru
        _
      %p165 = scmp.lt.s32.totalorder %s16, 4
      // Predicated region
      $region17: #{tpu_custom_call.1} parent=5 // pred_check
        %p166 = pneg %p165
      $region18: #{tpu_custom_call.1} parent=5 // pred_check_branch
        %168 = sbr.rel (%p166) target = $region20
      $region19: #{tpu_custom_call.1} parent=5 // pred_region
        // Predicated region
        $region21: #{tpu_custom_call.1} parent=19 // pred_check
          %p169 = pneg %p50
        $region22: #{tpu_custom_call.1} parent=19 // pred_check_branch
          %171 = sbr.rel (%p169) target = $region24
        $region23: #{tpu_custom_call.1} parent=19 // pred_region
          %s172 = sand.u32 %s40, 1
          %s173 = scalar_lea.sflag [#allocation4], %s172
          %s174 = sand.u32 %s40, 1
          %s175 = smul.addr %s174, 32
          %s176 = scalar_lea.vmem [#allocation3], %s175
          %s177 = smul.u32 2, %s23
          %s178 = smul.u32 4, %s24
          %s180 = ssub.s32 512, 512
          %181 = vsyncadd %s173, %s180
          %s182 = smul.addr %s177, 16
          %s183 = sadd.s32 %s178, %s182
          %s184 = smul.addr %s183, 64
          %s185 = scalar_lea.hbm %s0, %s184
          %s186 = sshll.u32 %s176, 4
          %s187 = int_to_ptr.vmem [resolvable:$true] %s186
          %192 = dma.hbm_to_vmem [thread:$0]  %s185, 512, %s187, %s173, 1024, 256, 16
        $region24: #{tpu_custom_call.1} parent=19 // pred_fallthru
          _
        // Predicated region
        $region25: #{tpu_custom_call.1} parent=19 // pred_check
          %p193 = pneg %p76
        $region26: #{tpu_custom_call.1} parent=19 // pred_check_branch
          %195 = sbr.rel (%p193) target = $region28
        $region27: #{tpu_custom_call.1} parent=19 // pred_region
          %s196 = sand.u32 %s16, 1
          %s197 = scalar_lea.sflag [#allocation7], %s196
          %s198 = sand.u32 %s66, 1
          %s199 = smul.addr %s198, 256
          %s200 = scalar_lea.vmem [#allocation6], %s199
          %s201 = smul.u32 64, %s24
          %s203 = ssub.s32 4096, 4096
          %204 = vsyncadd %s197, %s203
          %s205 = smul.addr %s201, 64
          %s206 = scalar_lea.hbm %s1, %s205
          %s207 = sshll.u32 %s200, 4
          %s208 = int_to_ptr.vmem [resolvable:$true] %s207
          %213 = dma.hbm_to_vmem [thread:$0]  %s206, 4096, %s208, %s197, 64, 64, 4
        $region28: #{tpu_custom_call.1} parent=19 // pred_fallthru
          _
      $region20: #{tpu_custom_call.1} parent=5 // pred_fallthru
        _
      %p214 = scmp.le.s32.totalorder 1, %s16
      %p215 = scmp.lt.s32.totalorder %s16, 5
      %p216 = pnand %p214, %p215
      %p217 = pneg %p216
      // Predicated region
      $region29: #{tpu_custom_call.1} parent=5 // pred_check
        _
      $region30: #{tpu_custom_call.1} parent=5 // pred_check_branch
        %219 = sbr.rel (%p216) target = $region32
      $region31: #{tpu_custom_call.1} parent=5 // pred_region
        %s220 = ssub.s32 %s16, 1
        %s221 = sand.u32 %s43, 1
        %s222 = scalar_lea.sflag [#allocation4], %s221
        %s223 = sand.u32 %s43, 1
        %s224 = smul.addr %s223, 32
        %s225 = scalar_lea.vmem [#allocation3], %s224
        // Predicated region
        $region33: #{tpu_custom_call.1} parent=31 // pred_check
          %p226 = pneg %p56
        $region34: #{tpu_custom_call.1} parent=31 // pred_check_branch
          %228 = sbr.rel (%p226) target = $region36
        $region35: #{tpu_custom_call.1} parent=31 // pred_region
          %229 = dma.done %s222, 512
        $region36: #{tpu_custom_call.1} parent=31 // pred_fallthru
          _
        %s230 = sand.u32 %s21, 1
        %s231 = scalar_lea.sflag [#allocation7], %s230
        %s232 = sand.u32 %s69, 1
        %s233 = smul.addr %s232, 256
        %s234 = scalar_lea.vmem [#allocation6], %s233
        // Predicated region
        $region37: #{tpu_custom_call.1} parent=31 // pred_check
          %p235 = pneg %p82
        $region38: #{tpu_custom_call.1} parent=31 // pred_check_branch
          %237 = sbr.rel (%p235) target = $region40
        $region39: #{tpu_custom_call.1} parent=31 // pred_region
          %238 = dma.done %s231, 4096
        $region40: #{tpu_custom_call.1} parent=31 // pred_fallthru
          _
        // Predicated region
        $region41: #{tpu_custom_call.1} parent=31 // pred_check
          %p239 = pneg %p108
        $region42: #{tpu_custom_call.1} parent=31 // pred_check_branch
          %241 = sbr.rel (%p239) target = $region44
        $region43: #{tpu_custom_call.1} parent=31 // pred_region
          %242 = dma.done [#allocation7], 256
        $region44: #{tpu_custom_call.1} parent=31 // pred_fallthru
          _
        %s243 = sand.u32 %s43, 1
        %s244 = scalar_lea.sflag [#allocation4], %s243
        %s245 = sand.u32 %s43, 1
        %s246 = smul.addr %s245, 32
        %s247 = scalar_lea.vmem [#allocation3], %s246
        %p248 = pneg %p56
        %p249 = pneg %p53
        %s250 = sand.u32 %s21, 1
        %s251 = scalar_lea.sflag [#allocation7], %s250
        %s252 = sand.u32 %s69, 1
        %s253 = smul.addr %s252, 256
        %s254 = scalar_lea.vmem [#allocation6], %s253
        %p255 = pneg %p82
        %p256 = pneg %p79
        %p257 = pneg %p108
        %p258 = pneg %p105
        %p259 = pneg %p134
        %p260 = pneg %p131
        %s261 = smul.u32 2, %s25
        %s262 = smul.u32 4, %s26
        %s263 = smul.u32 64, %s26
        %s264 = smul.u32 2, %s25
        %s265 = smul.u32 2, %s25
        %p267 = scmp.eq.s32.totalorder %s26, 0
        // Predicated region
        $region45: #{tpu_custom_call.1} parent=31 // pred_check
          %p268 = pneg %p267
        $region46: #{tpu_custom_call.1} parent=31 // pred_check_branch
          %270 = sbr.rel (%p268) target = $region48
        $region47: #{tpu_custom_call.1} parent=31 // pred_region
          %271 = vst [vmem:[#allocation2] sm:$0xff] 0.0
          %272 = vst [vmem:[#allocation2 + $0x8] sm:$0xff] 0.0
        $region48: #{tpu_custom_call.1} parent=31 // pred_fallthru
          _
        %v273 = vld [vmem:[#allocation2] sm:$0xff]
        %v274 = vld [vmem:[#allocation2 + $0x8] sm:$0xff]
        %v275 = vld [vmem:[%s225] sm:$0xff]
        %v276 = vld [vmem:[%s225 + $0x8] sm:$0xff]
        %v277 = vld [vmem:[%s225 + $0x10] sm:$0xff]
        %v278 = vld [vmem:[%s225 + $0x18] sm:$0xff]
        %v279 = vld [vmem:[%s234] sm:$0xf]
        %v280 = vld [vmem:[%s234 + $0x4] sm:$0xf]
        %v281 = vld [vmem:[%s234 + $0x8] sm:$0xf]
        %v282 = vld [vmem:[%s234 + $0xc] sm:$0xf]
        %v283 = vld [vmem:[%s234 + $0x10] sm:$0xf]
        %v284 = vld [vmem:[%s234 + $0x14] sm:$0xf]
        %v285 = vld [vmem:[%s234 + $0x18] sm:$0xf]
        %v286 = vld [vmem:[%s234 + $0x1c] sm:$0xf]
        %v287 = vld [vmem:[%s234 + $0x20] sm:$0xf]
        %v288 = vld [vmem:[%s234 + $0x24] sm:$0xf]
        %v289 = vld [vmem:[%s234 + $0x28] sm:$0xf]
        %v290 = vld [vmem:[%s234 + $0x2c] sm:$0xf]
        %v291 = vld [vmem:[%s234 + $0x30] sm:$0xf]
        %v292 = vld [vmem:[%s234 + $0x34] sm:$0xf]
        %v293 = vld [vmem:[%s234 + $0x38] sm:$0xf]
        %v294 = vld [vmem:[%s234 + $0x3c] sm:$0xf]
        %v295 = vld [vmem:[%s234 + $0x40] sm:$0xf]
        %v296 = vld [vmem:[%s234 + $0x44] sm:$0xf]
        %v297 = vld [vmem:[%s234 + $0x48] sm:$0xf]
        %v298 = vld [vmem:[%s234 + $0x4c] sm:$0xf]
        %v299 = vld [vmem:[%s234 + $0x50] sm:$0xf]
        %v300 = vld [vmem:[%s234 + $0x54] sm:$0xf]
        %v301 = vld [vmem:[%s234 + $0x58] sm:$0xf]
        %v302 = vld [vmem:[%s234 + $0x5c] sm:$0xf]
        %v303 = vld [vmem:[%s234 + $0x60] sm:$0xf]
        %v304 = vld [vmem:[%s234 + $0x64] sm:$0xf]
        %v305 = vld [vmem:[%s234 + $0x68] sm:$0xf]
        %v306 = vld [vmem:[%s234 + $0x6c] sm:$0xf]
        %v307 = vld [vmem:[%s234 + $0x70] sm:$0xf]
        %v308 = vld [vmem:[%s234 + $0x74] sm:$0xf]
        %v309 = vld [vmem:[%s234 + $0x78] sm:$0xf]
        %v310 = vld [vmem:[%s234 + $0x7c] sm:$0xf]
        %v311 = vld [vmem:[%s234 + $0x80] sm:$0xf]
        %v312 = vld [vmem:[%s234 + $0x84] sm:$0xf]
        %v313 = vld [vmem:[%s234 + $0x88] sm:$0xf]
        %v314 = vld [vmem:[%s234 + $0x8c] sm:$0xf]
        %v315 = vld [vmem:[%s234 + $0x90] sm:$0xf]
        %v316 = vld [vmem:[%s234 + $0x94] sm:$0xf]
        %v317 = vld [vmem:[%s234 + $0x98] sm:$0xf]
        %v318 = vld [vmem:[%s234 + $0x9c] sm:$0xf]
        %v319 = vld [vmem:[%s234 + $0xa0] sm:$0xf]
        %v320 = vld [vmem:[%s234 + $0xa4] sm:$0xf]
        %v321 = vld [vmem:[%s234 + $0xa8] sm:$0xf]
        %v322 = vld [vmem:[%s234 + $0xac] sm:$0xf]
        %v323 = vld [vmem:[%s234 + $0xb0] sm:$0xf]
        %v324 = vld [vmem:[%s234 + $0xb4] sm:$0xf]
        %v325 = vld [vmem:[%s234 + $0xb8] sm:$0xf]
        %v326 = vld [vmem:[%s234 + $0xbc] sm:$0xf]
        %v327 = vld [vmem:[%s234 + $0xc0] sm:$0xf]
        %v328 = vld [vmem:[%s234 + $0xc4] sm:$0xf]
        %v329 = vld [vmem:[%s234 + $0xc8] sm:$0xf]
        %v330 = vld [vmem:[%s234 + $0xcc] sm:$0xf]
        %v331 = vld [vmem:[%s234 + $0xd0] sm:$0xf]
        %v332 = vld [vmem:[%s234 + $0xd4] sm:$0xf]
        %v333 = vld [vmem:[%s234 + $0xd8] sm:$0xf]
        %v334 = vld [vmem:[%s234 + $0xdc] sm:$0xf]
        %v335 = vld [vmem:[%s234 + $0xe0] sm:$0xf]
        %v336 = vld [vmem:[%s234 + $0xe4] sm:$0xf]
        %v337 = vld [vmem:[%s234 + $0xe8] sm:$0xf]
        %v338 = vld [vmem:[%s234 + $0xec] sm:$0xf]
        %v339 = vld [vmem:[%s234 + $0xf0] sm:$0xf]
        %v340 = vld [vmem:[%s234 + $0xf4] sm:$0xf]
        %v341 = vld [vmem:[%s234 + $0xf8] sm:$0xf]
        %v342 = vld [vmem:[%s234 + $0xfc] sm:$0xf]
        %v347 = vunpack.c.l.b16 %v275
        %v348 = vunpack.c.h.b16 %v275
        %v349 = vunpack.c.l.b16 %v276
        %v350 = vunpack.c.h.b16 %v276
        %v351 = vunpack.c.l.b16 %v277
        %v352 = vunpack.c.h.b16 %v277
        %v353 = vunpack.c.l.b16 %v278
        %v354 = vunpack.c.h.b16 %v278
        %v355 = vpack.c.b16 %v351, %v347
        %v356 = vpack.c.b16 %v352, %v348
        %v357 = vpack.c.b16 %v353, %v349
        %v358 = vpack.c.b16 %v354, %v350
        %v427 = vunpack.c.l.b16 %v279
        %v428 = vunpack.c.l.b16 %v280
        %v429 = vunpack.c.l.b16 %v281
        %v430 = vunpack.c.l.b16 %v282
        %v431 = vunpack.c.l.b16 %v283
        %v432 = vunpack.c.l.b16 %v284
        %v433 = vunpack.c.l.b16 %v285
        %v434 = vunpack.c.l.b16 %v286
        %v435 = vunpack.c.l.b16 %v287
        %v436 = vunpack.c.l.b16 %v288
        %v437 = vunpack.c.l.b16 %v289
        %v438 = vunpack.c.l.b16 %v290
        %v439 = vunpack.c.l.b16 %v291
        %v440 = vunpack.c.l.b16 %v292
        %v441 = vunpack.c.l.b16 %v293
        %v442 = vunpack.c.l.b16 %v294
        %v443 = vunpack.c.l.b16 %v295
        %v444 = vunpack.c.l.b16 %v296
        %v445 = vunpack.c.l.b16 %v297
        %v446 = vunpack.c.l.b16 %v298
        %v447 = vunpack.c.l.b16 %v299
        %v448 = vunpack.c.l.b16 %v300
        %v449 = vunpack.c.l.b16 %v301
        %v450 = vunpack.c.l.b16 %v302
        %v451 = vunpack.c.l.b16 %v303
        %v452 = vunpack.c.l.b16 %v304
        %v453 = vunpack.c.l.b16 %v305
        %v454 = vunpack.c.l.b16 %v306
        %v455 = vunpack.c.l.b16 %v307
        %v456 = vunpack.c.l.b16 %v308
        %v457 = vunpack.c.l.b16 %v309
        %v458 = vunpack.c.l.b16 %v310
        %v459 = vunpack.c.l.b16 %v311
        %v460 = vunpack.c.l.b16 %v312
        %v461 = vunpack.c.l.b16 %v313
        %v462 = vunpack.c.l.b16 %v314
        %v463 = vunpack.c.l.b16 %v315
        %v464 = vunpack.c.l.b16 %v316
        %v465 = vunpack.c.l.b16 %v317
        %v466 = vunpack.c.l.b16 %v318
        %v467 = vunpack.c.l.b16 %v319
        %v468 = vunpack.c.l.b16 %v320
        %v469 = vunpack.c.l.b16 %v321
        %v470 = vunpack.c.l.b16 %v322
        %v471 = vunpack.c.l.b16 %v323
        %v472 = vunpack.c.l.b16 %v324
        %v473 = vunpack.c.l.b16 %v325
        %v474 = vunpack.c.l.b16 %v326
        %v475 = vunpack.c.l.b16 %v327
        %v476 = vunpack.c.l.b16 %v328
        %v477 = vunpack.c.l.b16 %v329
        %v478 = vunpack.c.l.b16 %v330
        %v479 = vunpack.c.l.b16 %v331
        %v480 = vunpack.c.l.b16 %v332
        %v481 = vunpack.c.l.b16 %v333
        %v482 = vunpack.c.l.b16 %v334
        %v483 = vunpack.c.l.b16 %v335
        %v484 = vunpack.c.l.b16 %v336
        %v485 = vunpack.c.l.b16 %v337
        %v486 = vunpack.c.l.b16 %v338
        %v487 = vunpack.c.l.b16 %v339
        %v488 = vunpack.c.l.b16 %v340
        %v489 = vunpack.c.l.b16 %v341
        %v490 = vunpack.c.l.b16 %v342
        %v491 = vpack.c.b16 %v428, %v427
        %v492 = vpack.c.b16 %v430, %v429
        %v493 = vpack.c.b16 %v432, %v431
        %v494 = vpack.c.b16 %v434, %v433
        %v495 = vpack.c.b16 %v436, %v435
        %v496 = vpack.c.b16 %v438, %v437
        %v497 = vpack.c.b16 %v440, %v439
        %v498 = vpack.c.b16 %v442, %v441
        %v499 = vpack.c.b16 %v444, %v443
        %v500 = vpack.c.b16 %v446, %v445
        %v501 = vpack.c.b16 %v448, %v447
        %v502 = vpack.c.b16 %v450, %v449
        %v503 = vpack.c.b16 %v452, %v451
        %v504 = vpack.c.b16 %v454, %v453
        %v505 = vpack.c.b16 %v456, %v455
        %v506 = vpack.c.b16 %v458, %v457
        %v507 = vpack.c.b16 %v460, %v459
        %v508 = vpack.c.b16 %v462, %v461
        %v509 = vpack.c.b16 %v464, %v463
        %v510 = vpack.c.b16 %v466, %v465
        %v511 = vpack.c.b16 %v468, %v467
        %v512 = vpack.c.b16 %v470, %v469
        %v513 = vpack.c.b16 %v472, %v471
        %v514 = vpack.c.b16 %v474, %v473
        %v515 = vpack.c.b16 %v476, %v475
        %v516 = vpack.c.b16 %v478, %v477
        %v517 = vpack.c.b16 %v480, %v479
        %v518 = vpack.c.b16 %v482, %v481
        %v519 = vpack.c.b16 %v484, %v483
        %v520 = vpack.c.b16 %v486, %v485
        %v521 = vpack.c.b16 %v488, %v487
        %v522 = vpack.c.b16 %v490, %v489
        %555 = vmatprep.subr.bf16.mxu0 0
        %556 = vmatpush1.bf16.msra.mxu0 %v491
        %557 = vmatprep.subr.bf16.mxu0 0
        %558 = vmatpush1.bf16.msra.mxu0 %v492
        %559 = vmatprep.subr.bf16.mxu0 0
        %560 = vmatpush1.bf16.msra.mxu0 %v493
        %561 = vmatprep.subr.bf16.mxu0 0
        %562 = vmatpush1.bf16.msra.mxu0 %v494
        %563 = vmatprep.subr.bf16.mxu0 0
        %564 = vmatpush1.bf16.msra.mxu0 %v495
        %565 = vmatprep.subr.bf16.mxu0 0
        %566 = vmatpush1.bf16.msra.mxu0 %v496
        %567 = vmatprep.subr.bf16.mxu0 0
        %568 = vmatpush1.bf16.msra.mxu0 %v497
        %569 = vmatprep.subr.bf16.mxu0 0
        %570 = vmatpush1.bf16.msra.mxu0 %v498
        %571 = vmatprep.subr.bf16.mxu0 0
        %572 = vmatpush1.bf16.msra.mxu0 %v499
        %573 = vmatprep.subr.bf16.mxu0 0
        %574 = vmatpush1.bf16.msra.mxu0 %v500
        %575 = vmatprep.subr.bf16.mxu0 0
        %576 = vmatpush1.bf16.msra.mxu0 %v501
        %577 = vmatprep.subr.bf16.mxu0 0
        %578 = vmatpush1.bf16.msra.mxu0 %v502
        %579 = vmatprep.subr.bf16.mxu0 0
        %580 = vmatpush1.bf16.msra.mxu0 %v503
        %581 = vmatprep.subr.bf16.mxu0 0
        %582 = vmatpush1.bf16.msra.mxu0 %v504
        %583 = vmatprep.subr.bf16.mxu0 0
        %584 = vmatpush1.bf16.msra.mxu0 %v505
        %585 = vmatprep.subr.bf16.mxu0 0
        %586 = vmatpush1.bf16.msra.mxu0 %v506
        %587 = vmatprep.mubr.bf16.mxu0 %v356
        %588 = vmatmul.mubr.bf16.gmra.mrb[0].mxu0 %v355
        %v589 = vpop.f32.mrb[0].mxu0
        %v590 = vadd.f32 0.0, %v589
        %v591 = vpop.f32.mrb[0].mxu0
        %v592 = vpop.f32.mrb[0].mxu0
        %v593 = vadd.f32 0.0, %v592
        %v594 = vpop.f32.mrb[0].mxu0
        %595 = vdwg.mxu0
        %596 = vmatprep.subr.bf16.mxu0 0
        %597 = vmatpush1.bf16.msra.mxu0 %v507
        %598 = vmatprep.subr.bf16.mxu0 0
        %599 = vmatpush1.bf16.msra.mxu0 %v508
        %600 = vmatprep.subr.bf16.mxu0 0
        %601 = vmatpush1.bf16.msra.mxu0 %v509
        %602 = vmatprep.subr.bf16.mxu0 0
        %603 = vmatpush1.bf16.msra.mxu0 %v510
        %604 = vmatprep.subr.bf16.mxu0 0
        %605 = vmatpush1.bf16.msra.mxu0 %v511
        %606 = vmatprep.subr.bf16.mxu0 0
        %607 = vmatpush1.bf16.msra.mxu0 %v512
        %608 = vmatprep.subr.bf16.mxu0 0
        %609 = vmatpush1.bf16.msra.mxu0 %v513
        %610 = vmatprep.subr.bf16.mxu0 0
        %611 = vmatpush1.bf16.msra.mxu0 %v514
        %612 = vmatprep.subr.bf16.mxu0 0
        %613 = vmatpush1.bf16.msra.mxu0 %v515
        %614 = vmatprep.subr.bf16.mxu0 0
        %615 = vmatpush1.bf16.msra.mxu0 %v516
        %616 = vmatprep.subr.bf16.mxu0 0
        %617 = vmatpush1.bf16.msra.mxu0 %v517
        %618 = vmatprep.subr.bf16.mxu0 0
        %619 = vmatpush1.bf16.msra.mxu0 %v518
        %620 = vmatprep.subr.bf16.mxu0 0
        %621 = vmatpush1.bf16.msra.mxu0 %v519
        %622 = vmatprep.subr.bf16.mxu0 0
        %623 = vmatpush1.bf16.msra.mxu0 %v520
        %624 = vmatprep.subr.bf16.mxu0 0
        %625 = vmatpush1.bf16.msra.mxu0 %v521
        %626 = vmatprep.subr.bf16.mxu0 0
        %627 = vmatpush1.bf16.msra.mxu0 %v522
        %628 = vmatprep.mubr.bf16.mxu0 %v358
        %629 = vmatmul.mubr.bf16.gmra.mrb[0].mxu0 %v357
        %v630 = vpop.f32.mrb[0].mxu0
        %v631 = vadd.f32 %v590, %v630
        %v632 = vpop.f32.mrb[0].mxu0
        %v633 = vpop.f32.mrb[0].mxu0
        %v634 = vadd.f32 %v593, %v633
        %v635 = vpop.f32.mrb[0].mxu0
        %636 = vdwg.mxu0
        %v637 = vadd.f32 %v273, %v631
        %v638 = vadd.f32 %v274, %v634
        %639 = vst [vmem:[#allocation2] sm:$0xff] %v637
        %640 = vst [vmem:[#allocation2 + $0x8] sm:$0xff] %v638
        %p641 = scmp.eq.s32.totalorder %s26, 3
        // Predicated region
        $region49: #{tpu_custom_call.1} parent=31 // pred_check
          %p642 = pneg %p641
        $region50: #{tpu_custom_call.1} parent=31 // pred_check_branch
          %644 = sbr.rel (%p642) target = $region52
        $region51: #{tpu_custom_call.1} parent=31 // pred_region
          %v645 = vld [vmem:[#allocation2] sm:$0xff]
          %v646 = vld [vmem:[#allocation2 + $0x8] sm:$0xff]
          %v647 = vld [vmem:[#allocation8] sm:$0xff]
          %v648 = vld [vmem:[#allocation8 + $0x8] sm:$0xff]
          %v649 = vadd.f32 %v645, %v647
          %v650 = vadd.f32 %v646, %v648
          %651 = vst [vmem:[#allocation9] sm:$0xff] %v649
          %652 = vst [vmem:[#allocation9 + $0x8] sm:$0xff] %v650
        $region52: #{tpu_custom_call.1} parent=31 // pred_fallthru
          _
        // Predicated region
        $region53: #{tpu_custom_call.1} parent=31 // pred_check
          %p653 = pneg %p131
        $region54: #{tpu_custom_call.1} parent=31 // pred_check_branch
          %655 = sbr.rel (%p653) target = $region56
        $region55: #{tpu_custom_call.1} parent=31 // pred_region
          %s656 = smul.u32 2, %s25
          %s658 = ssub.s32 256, 256
          %659 = vsyncadd [#allocation5], %s658
          %s660 = smul.addr %s656, 128
          %s661 = scalar_lea.hbm %s3, %s660
          %s662 = sshll.u32 [#allocation9], 4
          %s663 = int_to_ptr.vmem [resolvable:$true] %s662
          %668 = dma.vmem_to_hbm [thread:$0]  %s663, 256, %s661, [#allocation5], 128, 128, 8
        $region56: #{tpu_custom_call.1} parent=31 // pred_fallthru
          _
        // Predicated region
        $region57: #{tpu_custom_call.1} parent=31 // pred_check
          %p669 = pneg %p131
        $region58: #{tpu_custom_call.1} parent=31 // pred_check_branch
          %671 = sbr.rel (%p669) target = $region60
        $region59: #{tpu_custom_call.1} parent=31 // pred_region
          %672 = dma.done [#allocation5], 256
        $region60: #{tpu_custom_call.1} parent=31 // pred_fallthru
          _
      $region32: #{tpu_custom_call.1} parent=5 // pred_fallthru
        _
      %p673 = scmp.le.s32.totalorder 2, %s16
      // Predicated region
      $region61: #{tpu_custom_call.1} parent=5 // pred_check
        %p674 = pneg %p673
      $region62: #{tpu_custom_call.1} parent=5 // pred_check_branch
        %676 = sbr.rel (%p674) target = $region64
      $region63: #{tpu_custom_call.1} parent=5 // pred_region
        %s677 = ssub.s32 %s16, 2
      $region64: #{tpu_custom_call.1} parent=5 // pred_fallthru
        _
    $region6: #{tpu_custom_call.1} parent=1 // loop_footer
      %s20 = sadd.s32 1, %s16
    $region7: #{tpu_custom_call.1} parent=1 // loop_footer_branch
      %15 = sbr.rel target = $region3
    $region8: #{tpu_custom_call.1} parent=1 // loop_exit
      _
    %678 = vsyncpa [#allocation4], 1
    %s679 = scalar_lea.sflag [#allocation4], 1
    %680 = vsyncpa %s679, 1
    %681 = vsyncpa [#allocation7], 1
    %s682 = scalar_lea.sflag [#allocation7], 1
    %683 = vsyncpa %s682, 1
    %684 = vsyncpa [#allocation5], 1
    %s685 = scalar_lea.sflag [#allocation5], 1
    %686 = vsyncpa %s685, 1

</llo_original>
